<compile_context>
chip_gen: v5e
topology: v5e:2x2
jax: 0.10.0
libtpu: 0.0.40
codegen_flags: <defaults>
</compile_context>

<pallas_src>
import jax
import jax.numpy as jnp
import numpy as np
from jax.experimental import pallas as pl
from jax.experimental.pallas import tpu as pltpu

NEG_SLOPE = 0.01   # nn.LeakyReLU default
EPS = 1e-6         # BatchNorm eps from partial(nn.BatchNorm2d, eps=1e-06)


def _leaky(x):
    # max(x, 0.01*x) == LeakyReLU(0.01) for all x.
    return jnp.maximum(x, NEG_SLOPE * x)


# ------------------------------- fused kernel -------------------------------

def conv_block_decode(x_nchw, params):
    """Forward of ConvBlockDecode (stride=1, res_conv=True, x_t=None).

    x_nchw: (N, Cin, H, W) bf16 in PyTorch NCHW layout.
    Returns (out, x2) in NCHW (bf16), matching `return (x, x2)` of the module.
    """
    N, Cin, H, W = x_nchw.shape
    HW = H * W
    PAD = W + 1   # halo so every tap offset dh*W+dw (dh,dw in {-1,0,1}) stays in-bounds

    w1s = params["w1s"]                      # (Cmed, Cin)        bf16, bn1 folded
    w2g = params["w2g"]                      # (3, Cmed, 3*Cmed)  bf16, bn2 folded
    w3c = params["w3c"]                      # (Cout, Cmed+Cin)   bf16, bn3/bnr folded
    Cmed = w1s.shape[0]
    Cout = w3c.shape[0]

    # NCHW per image is already (C, H*W): free reshape, no transpose, lane-dense I/O.
    x2d = x_nchw.reshape(N, Cin, HW)

    def kernel(x_ref, w1_ref, b1_ref, w2g_ref, b2_ref, w3c_ref, b3c_ref,
               out_ref, x2_ref, xpad_ref):
        xv = x_ref[0]                                          # (Cin, HW) bf16

        # ---- stage 1: conv1 (1x1 transposed, bn1 folded) + bias + act1 -------
        x1 = jnp.dot(w1_ref[...], xv, preferred_element_type=jnp.float32)
        x1 = _leaky(x1 + b1_ref[...])                          # (Cmed, HW) f32

        # Stash x1 (bf16) in a halo-padded flat slab (VMEM only, never HBM).
        xpad_ref[:, 0:PAD] = jnp.zeros((Cmed, PAD), jnp.bfloat16)
        xpad_ref[:, PAD + HW:PAD + HW + PAD] = jnp.zeros((Cmed, PAD), jnp.bfloat16)
        xpad_ref[:, PAD:PAD + HW] = x1.astype(jnp.bfloat16)

        # ---- stage 2: conv2 (3x3 transposed s=1,p=1, bn2 folded) + act2 ------
        # Stack the three dh-shifted slabs once along the channel/sublane axis,
        # then one (Cmed, 3*Cmed) matmul per dw group; W-boundary wraparound is
        # removed with per-column masks built from an in-kernel iota.
        stack = jnp.concatenate(
            [xpad_ref[:, 0:HW + 2],                 # dh = -1  (start PAD - W - 1)
             xpad_ref[:, W:W + HW + 2],             # dh =  0  (start PAD - 1)
             xpad_ref[:, 2 * W:2 * W + HW + 2]],    # dh = +1  (start PAD + W - 1)
            axis=0)                                             # (3*Cmed, HW+2) bf16

        col = jax.lax.broadcasted_iota(jnp.int32, (1, HW), 1) % W

        acc = jnp.dot(w2g_ref[1], stack[:, 1:1 + HW],           # dw = 0
                      preferred_element_type=jnp.float32)
        g_l = jnp.dot(w2g_ref[0], stack[:, 0:HW],                # dw = -1
                      preferred_element_type=jnp.float32)
        acc = acc + jnp.where(col >= 1, g_l, 0.0)
        g_r = jnp.dot(w2g_ref[2], stack[:, 2:2 + HW],            # dw = +1
                      preferred_element_type=jnp.float32)
        acc = acc + jnp.where(col <= W - 2, g_r, 0.0)

        x2f = _leaky(acc + b2_ref[...])                          # (Cmed, HW) f32
        x2b = x2f.astype(jnp.bfloat16)
        x2_ref[0] = x2b

        # ---- stage 3: merged conv3(1x1)+bn3 and residual(1x1)+bn -> act3 -----
        z = jnp.concatenate([x2b, xv], axis=0)                   # (Cmed+Cin, HW) bf16
        y = jnp.dot(w3c_ref[...], z, preferred_element_type=jnp.float32)
        out_ref[0] = _leaky(y + b3c_ref[...]).astype(jnp.bfloat16)

    out2d, x2_2d = pl.pallas_call(
        kernel,
        out_shape=(jax.ShapeDtypeStruct((N, Cout, HW), jnp.bfloat16),
                   jax.ShapeDtypeStruct((N, Cmed, HW), jnp.bfloat16)),
        grid_spec=pltpu.PrefetchScalarGridSpec(
            num_scalar_prefetch=0,
            grid=(N,),
            in_specs=[
                pl.BlockSpec((1, Cin, HW), lambda n: (n, 0, 0)),               # x
                pl.BlockSpec((Cmed, Cin), lambda n: (0, 0)),                   # w1s
                pl.BlockSpec((Cmed, 1), lambda n: (0, 0)),                     # b1
                pl.BlockSpec((3, Cmed, 3 * Cmed), lambda n: (0, 0, 0)),        # w2g
                pl.BlockSpec((Cmed, 1), lambda n: (0, 0)),                     # b2
                pl.BlockSpec((Cout, Cmed + Cin), lambda n: (0, 0)),            # w3c
                pl.BlockSpec((Cout, 1), lambda n: (0, 0)),                     # b3c
            ],
            out_specs=[
                pl.BlockSpec((1, Cout, HW), lambda n: (n, 0, 0)),
                pl.BlockSpec((1, Cmed, HW), lambda n: (n, 0, 0)),
            ],
            scratch_shapes=[pltpu.VMEM((Cmed, HW + 2 * PAD), jnp.bfloat16)],
        ),
        compiler_params=pltpu.CompilerParams(
            dimension_semantics=("parallel",),
            vmem_limit_bytes=32 * 1024 * 1024),
    )(x2d, w1s, params["b1"], w2g, params["b2"], w3c, params["b3c"])

    return out2d.reshape(N, Cout, H, W), x2_2d.reshape(N, Cmed, H, W)


# --------------------------- deterministic params ---------------------------

def make_params(key, inplanes, outplanes):
    expansion = 4
    med = outplanes // expansion if outplanes > expansion else outplanes
    ks = jax.random.split(key, 8)

    # PyTorch ConvTranspose2d weight layout: (in_channels, out_channels, kH, kW)
    w1_t = 0.2 * jax.random.normal(ks[0], (inplanes, med, 1, 1), jnp.float32)
    w2_t = 0.2 * jax.random.normal(ks[1], (med, med, 3, 3), jnp.float32)
    w3_t = 0.2 * jax.random.normal(ks[2], (med, outplanes, 1, 1), jnp.float32)
    wr_t = 0.2 * jax.random.normal(ks[3], (inplanes, outplanes, 1, 1), jnp.float32)

    def bn_affine(k, c):
        k1, k2, k3, k4 = jax.random.split(k, 4)
        gamma = 1.0 + 0.1 * jax.random.normal(k1, (c,), jnp.float32)
        beta = 0.1 * jax.random.normal(k2, (c,), jnp.float32)
        rmean = 0.1 * jax.random.normal(k3, (c,), jnp.float32)
        rvar = 0.5 + jax.random.uniform(k4, (c,), jnp.float32)
        scale = gamma / jnp.sqrt(rvar + EPS)
        shift = beta - rmean * scale
        return scale.reshape(c, 1), shift.reshape(c, 1)   # (C, 1): channel on sublane

    s1, b1 = bn_affine(ks[4], med)
    s2, b2 = bn_affine(ks[5], med)
    s3, b3 = bn_affine(ks[6], outplanes)
    sr, br = bn_affine(ks[7], outplanes)

    # 1x1 ConvTranspose2d: y[o] = sum_i W[i, o] x[i]  -> store W^T (Cout, Cin)
    w1t = w1_t[:, :, 0, 0].T                               # (med, in)   f32
    w3t = w3_t[:, :, 0, 0].T                               # (out, med)  f32
    wrt = wr_t[:, :, 0, 0].T                               # (out, in)   f32
    # 3x3 ConvTranspose2d (s=1, p=1) == regular 3x3 conv with flipped taps and
    # swapped channels:  w2tap[kh, kw, o, i] = Wt[i, o, 2-kh, 2-kw]
    w2tap = jnp.flip(w2_t, axis=(2, 3)).transpose(2, 3, 1, 0)   # (3,3,o,i) f32

    # Fold BN scales into the weights in f32, cast to bf16 once.
    w1s = (s1 * w1t).astype(jnp.bfloat16)                              # (med, in)
    w2tap_bf = (w2tap * s2[:, 0][None, None, :, None]).astype(jnp.bfloat16)
    # Group per dw: w2g[kw][o, kh*med + i] = w2tap_bf[kh, kw, o, i]
    w2g = w2tap_bf.transpose(1, 2, 0, 3).reshape(3, med, 3 * med)
    w3s = s3 * w3t                                                     # (out, med)
    wrs = sr * wrt                                                     # (out, in)
    w3c = jnp.concatenate([w3s, wrs], axis=1).astype(jnp.bfloat16)     # (out, med+in)
    b3c = b3 + br                                                      # (out, 1)

    return {
        "w1s": w1s, "b1": b1,
        "w2g": w2g, "w2tap": w2tap_bf, "b2": b2,
        "w3c": w3c, "b3c": b3c,
    }


# ----------------------------- pure-JAX reference ---------------------------

def reference(x_nchw, params):
    """Module semantics (BN folded into weights, identical quantized weights)."""
    x = x_nchw.astype(jnp.float32)                        # (N, Cin, H, W)
    N, Cin, H, W = x.shape
    w1 = params["w1s"].astype(jnp.float32)                # (med, in)
    w2 = params["w2tap"].astype(jnp.float32)              # (3, 3, o, i)
    w3c = params["w3c"].astype(jnp.float32)               # (out, med+in)
    Cmed = w1.shape[0]

    def bcast(p):                                         # (C,1) -> (1,C,1,1)
        return p[:, 0][None, :, None, None]

    hp = dict(precision="highest")
    x1 = _leaky(jnp.einsum("oi,nihw->nohw", w1, x, **hp) + bcast(params["b1"]))
    x1p = jnp.pad(x1, ((0, 0), (0, 0), (1, 1), (1, 1)))
    acc = jnp.zeros((N, Cmed, H, W), jnp.float32)
    for kh in range(3):
        for kw in range(3):
            acc = acc + jnp.einsum("oi,nihw->nohw", w2[kh, kw],
                                   x1p[:, :, kh:kh + H, kw:kw + W], **hp)
    x2 = _leaky(acc + bcast(params["b2"]))
    w3 = w3c[:, :Cmed]
    wr = w3c[:, Cmed:]
    out = _leaky(jnp.einsum("oi,nihw->nohw", w3, x2, **hp)
                 + jnp.einsum("oi,nihw->nohw", wr, x, **hp)
                 + bcast(params["b3c"]))
    return out, x2


if __name__ == "__main__":
    inplanes, outplanes = 8, 16          # med_planes = 16 // 4 = 4
    N, H, W = 2, 16, 16                  # H*W = 256 -> lane-dense (2 x 128)
    key = jax.random.PRNGKey(0)
    kx, kp = jax.random.split(key)
    x = jax.random.normal(kx, (N, inplanes, H, W), jnp.float32).astype(jnp.bfloat16)
    params = make_params(kp, inplanes, outplanes)

    out, x2 = conv_block_decode(x, params)
    out = jax.block_until_ready(out)
    x2 = jax.block_until_ready(x2)

    ref_out, ref_x2 = reference(x, params)
    np.testing.assert_allclose(np.asarray(out.astype(jnp.float32)),
                               np.asarray(ref_out), rtol=2e-2, atol=2e-2)
    np.testing.assert_allclose(np.asarray(x2.astype(jnp.float32)),
                               np.asarray(ref_x2), rtol=2e-2, atol=2e-2)

    print("KERNEL_OK")
</pallas_src>

<mosaic_0001>
module attributes {stable_mosaic.version = 11 : i64} {
  func.func @kernel(%arg0: i32, %arg1: memref<1x8x256xbf16, #tpu.memory_space<vmem>>, %arg2: memref<4x8xbf16, #tpu.memory_space<vmem>>, %arg3: memref<4x1xf32, #tpu.memory_space<vmem>>, %arg4: memref<3x4x12xbf16, #tpu.memory_space<vmem>>, %arg5: memref<4x1xf32, #tpu.memory_space<vmem>>, %arg6: memref<16x12xbf16, #tpu.memory_space<vmem>>, %arg7: memref<16x1xf32, #tpu.memory_space<vmem>>, %arg8: memref<1x16x256xbf16, #tpu.memory_space<vmem>>, %arg9: memref<1x4x256xbf16, #tpu.memory_space<vmem>>, %arg10: memref<4x290xbf16, #tpu.memory_space<vmem>>) attributes {dimension_semantics = [#tpu.dimension_semantics<parallel>], iteration_bounds = array<i64: 2>, scalar_prefetch = 0 : i64, scratch_operands = 1 : i64, tpu.core_type = #tpu.core_type<tc>, window_params = [{transform_indices = @transform_0, window_bounds = array<i64: 1, 8, 256>}, {pipeline_mode = #tpu.pipeline_mode<synchronous>, transform_indices = @transform_1, window_bounds = array<i64: 4, 8>}, {pipeline_mode = #tpu.pipeline_mode<synchronous>, transform_indices = @transform_2, window_bounds = array<i64: 4, 1>}, {pipeline_mode = #tpu.pipeline_mode<synchronous>, transform_indices = @transform_3, window_bounds = array<i64: 3, 4, 12>}, {pipeline_mode = #tpu.pipeline_mode<synchronous>, transform_indices = @transform_4, window_bounds = array<i64: 4, 1>}, {pipeline_mode = #tpu.pipeline_mode<synchronous>, transform_indices = @transform_5, window_bounds = array<i64: 16, 12>}, {pipeline_mode = #tpu.pipeline_mode<synchronous>, transform_indices = @transform_6, window_bounds = array<i64: 16, 1>}, {transform_indices = @transform_7, window_bounds = array<i64: 1, 16, 256>}, {transform_indices = @transform_8, window_bounds = array<i64: 1, 4, 256>}]} {
    %c0 = arith.constant 0 : index
    %c0_0 = arith.constant 0 : index
    %c0_1 = arith.constant 0 : index
    %0 = vector.load %arg1[%c0, %c0_0, %c0_1] : memref<1x8x256xbf16, #tpu.memory_space<vmem>>, vector<1x8x256xbf16>
    %1 = vector.shape_cast %0 : vector<1x8x256xbf16> to vector<8x256xbf16>
    %c0_2 = arith.constant 0 : index
    %c0_3 = arith.constant 0 : index
    %2 = vector.load %arg2[%c0_2, %c0_3] : memref<4x8xbf16, #tpu.memory_space<vmem>>, vector<4x8xbf16>
    %cst = arith.constant dense<0.000000e+00> : vector<4x256xf32>
    %3 = tpu.matmul %2, %1, %cst {dimension_numbers = #tpu.dot_dimension_numbers<[1], [0], [0], [1], [0, 0, 1, 1], [], []>} : vector<4x8xbf16>, vector<8x256xbf16>, vector<4x256xf32> -> vector<4x256xf32>
    %c0_4 = arith.constant 0 : index
    %c0_5 = arith.constant 0 : index
    %4 = vector.load %arg3[%c0_4, %c0_5] : memref<4x1xf32, #tpu.memory_space<vmem>>, vector<4x1xf32>
    %5 = vector.broadcast %4 : vector<4x1xf32> to vector<4x256xf32>
    %6 = arith.addf %3, %5 : vector<4x256xf32>
    %cst_6 = arith.constant 0.00999999977 : f32
    %7 = vector.broadcast %cst_6 : f32 to vector<4x256xf32>
    %8 = arith.mulf %7, %6 : vector<4x256xf32>
    %9 = arith.maximumf %6, %8 : vector<4x256xf32>
    %cst_7 = arith.constant 0.000000e+00 : bf16
    %10 = vector.broadcast %cst_7 : bf16 to vector<4x17xbf16>
    %c0_8 = arith.constant 0 : index
    %c0_9 = arith.constant 0 : index
    %11 = vector.load %arg10[%c0_8, %c0_9] : memref<4x290xbf16, #tpu.memory_space<vmem>>, vector<4x17xbf16>
    tpu.vector_store %arg10[%c0_8, %c0_9], %10 {strides = array<i32>} : memref<4x290xbf16, #tpu.memory_space<vmem>>, vector<4x17xbf16>,
    %cst_10 = arith.constant 0.000000e+00 : bf16
    %12 = vector.broadcast %cst_10 : bf16 to vector<4x17xbf16>
    %c0_11 = arith.constant 0 : index
    %c273 = arith.constant 273 : index
    %13 = vector.load %arg10[%c0_11, %c273] : memref<4x290xbf16, #tpu.memory_space<vmem>>, vector<4x17xbf16>
    tpu.vector_store %arg10[%c0_11, %c273], %12 {strides = array<i32>} : memref<4x290xbf16, #tpu.memory_space<vmem>>, vector<4x17xbf16>,
    %14 = arith.truncf %9 : vector<4x256xf32> to vector<4x256xbf16>
    %c0_12 = arith.constant 0 : index
    %c17 = arith.constant 17 : index
    %15 = vector.load %arg10[%c0_12, %c17] : memref<4x290xbf16, #tpu.memory_space<vmem>>, vector<4x256xbf16>
    tpu.vector_store %arg10[%c0_12, %c17], %14 {strides = array<i32>} : memref<4x290xbf16, #tpu.memory_space<vmem>>, vector<4x256xbf16>,
    %c0_13 = arith.constant 0 : index
    %c0_14 = arith.constant 0 : index
    %16 = vector.load %arg10[%c0_13, %c0_14] : memref<4x290xbf16, #tpu.memory_space<vmem>>, vector<4x258xbf16>
    %c0_15 = arith.constant 0 : index
    %c16 = arith.constant 16 : index
    %17 = vector.load %arg10[%c0_15, %c16] : memref<4x290xbf16, #tpu.memory_space<vmem>>, vector<4x258xbf16>
    %c0_16 = arith.constant 0 : index
    %c32 = arith.constant 32 : index
    %18 = vector.load %arg10[%c0_16, %c32] : memref<4x290xbf16, #tpu.memory_space<vmem>>, vector<4x258xbf16>
    %19 = tpu.concatenate %16, %17, %18 in 0 : vector<4x258xbf16>, vector<4x258xbf16>, vector<4x258xbf16> -> vector<12x258xbf16>
    %20 = tpu.iota {dimensions = array<i32: 1>} : vector<1x256xi32>
    %c16_i32 = arith.constant 16 : i32
    %c0_i32 = arith.constant 0 : i32
    %21 = arith.cmpi eq, %c16_i32, %c0_i32 : i32
    %c1_i32 = arith.constant 1 : i32
    %22 = arith.select %21, %c1_i32, %c16_i32 : i32
    %23 = vector.broadcast %22 : i32 to vector<1x256xi32>
    %24 = arith.remsi %20, %23 : vector<1x256xi32>
    %c0_i32_17 = arith.constant 0 : i32
    %25 = vector.broadcast %c0_i32_17 : i32 to vector<1x256xi32>
    %26 = arith.cmpi ne, %24, %25 : vector<1x256xi32>
    %c0_i32_18 = arith.constant 0 : i32
    %27 = vector.broadcast %c0_i32_18 : i32 to vector<1x256xi32>
    %28 = arith.cmpi slt, %24, %27 : vector<1x256xi32>
    %c0_i32_19 = arith.constant 0 : i32
    %29 = arith.cmpi slt, %22, %c0_i32_19 : i32
    %30 = vector.broadcast %29 : i1 to vector<1x256xi1>
    %31 = vector.broadcast %30 : vector<1x256xi1> to vector<1x256xi1>
    %32 = arith.xori %28, %31 : vector<1x256xi1>
    %33 = arith.andi %32, %26 : vector<1x256xi1>
    %34 = vector.broadcast %22 : i32 to vector<1x256xi32>
    %35 = arith.addi %24, %34 : vector<1x256xi32>
    %36 = arith.select %33, %35, %24 : vector<1x256xi1>, vector<1x256xi32>
    %c1 = arith.constant 1 : index
    %c0_20 = arith.constant 0 : index
    %c0_21 = arith.constant 0 : index
    %37 = vector.load %arg4[%c1, %c0_20, %c0_21] : memref<3x4x12xbf16, #tpu.memory_space<vmem>>, vector<1x4x12xbf16>
    %38 = vector.shape_cast %37 : vector<1x4x12xbf16> to vector<4x12xbf16>
    %39 = vector.extract_strided_slice %19 {offsets = [0, 1], sizes = [12, 256], strides = [1, 1]} : vector<12x258xbf16> to vector<12x256xbf16>
    %cst_22 = arith.constant dense<0.000000e+00> : vector<4x256xf32>
    %40 = tpu.matmul %38, %39, %cst_22 {dimension_numbers = #tpu.dot_dimension_numbers<[1], [0], [0], [1], [0, 0, 1, 1], [], []>} : vector<4x12xbf16>, vector<12x256xbf16>, vector<4x256xf32> -> vector<4x256xf32>
    %c0_23 = arith.constant 0 : index
    %c0_24 = arith.constant 0 : index
    %c0_25 = arith.constant 0 : index
    %41 = vector.load %arg4[%c0_23, %c0_24, %c0_25] : memref<3x4x12xbf16, #tpu.memory_space<vmem>>, vector<1x4x12xbf16>
    %42 = vector.shape_cast %41 : vector<1x4x12xbf16> to vector<4x12xbf16>
    %43 = vector.extract_strided_slice %19 {offsets = [0, 0], sizes = [12, 256], strides = [1, 1]} : vector<12x258xbf16> to vector<12x256xbf16>
    %cst_26 = arith.constant dense<0.000000e+00> : vector<4x256xf32>
    %44 = tpu.matmul %42, %43, %cst_26 {dimension_numbers = #tpu.dot_dimension_numbers<[1], [0], [0], [1], [0, 0, 1, 1], [], []>} : vector<4x12xbf16>, vector<12x256xbf16>, vector<4x256xf32> -> vector<4x256xf32>
    %c1_i32_27 = arith.constant 1 : i32
    %45 = vector.broadcast %c1_i32_27 : i32 to vector<1x256xi32>
    %46 = arith.cmpi sge, %36, %45 : vector<1x256xi32>
    %cst_28 = arith.constant 0.000000e+00 : f32
    %47 = vector.shape_cast %46 : vector<1x256xi1> to vector<1x256xi1>
    %48 = vector.broadcast %47 : vector<1x256xi1> to vector<4x256xi1>
    %49 = vector.broadcast %cst_28 : f32 to vector<4x256xf32>
    %50 = arith.select %48, %44, %49 : vector<4x256xi1>, vector<4x256xf32>
    %51 = arith.addf %40, %50 : vector<4x256xf32>
    %c2 = arith.constant 2 : index
    %c0_29 = arith.constant 0 : index
    %c0_30 = arith.constant 0 : index
    %52 = vector.load %arg4[%c2, %c0_29, %c0_30] : memref<3x4x12xbf16, #tpu.memory_space<vmem>>, vector<1x4x12xbf16>
    %53 = vector.shape_cast %52 : vector<1x4x12xbf16> to vector<4x12xbf16>
    %54 = vector.extract_strided_slice %19 {offsets = [0, 2], sizes = [12, 256], strides = [1, 1]} : vector<12x258xbf16> to vector<12x256xbf16>
    %cst_31 = arith.constant dense<0.000000e+00> : vector<4x256xf32>
    %55 = tpu.matmul %53, %54, %cst_31 {dimension_numbers = #tpu.dot_dimension_numbers<[1], [0], [0], [1], [0, 0, 1, 1], [], []>} : vector<4x12xbf16>, vector<12x256xbf16>, vector<4x256xf32> -> vector<4x256xf32>
    %c14_i32 = arith.constant 14 : i32
    %56 = vector.broadcast %c14_i32 : i32 to vector<1x256xi32>
    %57 = arith.cmpi sle, %36, %56 : vector<1x256xi32>
    %cst_32 = arith.constant 0.000000e+00 : f32
    %58 = vector.shape_cast %57 : vector<1x256xi1> to vector<1x256xi1>
    %59 = vector.broadcast %58 : vector<1x256xi1> to vector<4x256xi1>
    %60 = vector.broadcast %cst_32 : f32 to vector<4x256xf32>
    %61 = arith.select %59, %55, %60 : vector<4x256xi1>, vector<4x256xf32>
    %62 = arith.addf %51, %61 : vector<4x256xf32>
    %c0_33 = arith.constant 0 : index
    %c0_34 = arith.constant 0 : index
    %63 = vector.load %arg5[%c0_33, %c0_34] : memref<4x1xf32, #tpu.memory_space<vmem>>, vector<4x1xf32>
    %64 = vector.broadcast %63 : vector<4x1xf32> to vector<4x256xf32>
    %65 = arith.addf %62, %64 : vector<4x256xf32>
    %cst_35 = arith.constant 0.00999999977 : f32
    %66 = vector.broadcast %cst_35 : f32 to vector<4x256xf32>
    %67 = arith.mulf %66, %65 : vector<4x256xf32>
    %68 = arith.maximumf %65, %67 : vector<4x256xf32>
    %69 = arith.truncf %68 : vector<4x256xf32> to vector<4x256xbf16>
    %c0_36 = arith.constant 0 : index
    %c0_37 = arith.constant 0 : index
    %c0_38 = arith.constant 0 : index
    %70 = vector.load %arg9[%c0_36, %c0_37, %c0_38] : memref<1x4x256xbf16, #tpu.memory_space<vmem>>, vector<1x4x256xbf16>
    %71 = vector.shape_cast %70 : vector<1x4x256xbf16> to vector<4x256xbf16>
    %72 = vector.shape_cast %69 : vector<4x256xbf16> to vector<1x4x256xbf16>
    tpu.vector_store %arg9[%c0_36, %c0_37, %c0_38], %72 {strides = array<i32>} : memref<1x4x256xbf16, #tpu.memory_space<vmem>>, vector<1x4x256xbf16>,
    %73 = tpu.concatenate %69, %1 in 0 : vector<4x256xbf16>, vector<8x256xbf16> -> vector<12x256xbf16>
    %c0_39 = arith.constant 0 : index
    %c0_40 = arith.constant 0 : index
    %74 = vector.load %arg6[%c0_39, %c0_40] : memref<16x12xbf16, #tpu.memory_space<vmem>>, vector<16x12xbf16>
    %cst_41 = arith.constant dense<0.000000e+00> : vector<16x256xf32>
    %75 = tpu.matmul %74, %73, %cst_41 {dimension_numbers = #tpu.dot_dimension_numbers<[1], [0], [0], [1], [0, 0, 1, 1], [], []>} : vector<16x12xbf16>, vector<12x256xbf16>, vector<16x256xf32> -> vector<16x256xf32>
    %c0_42 = arith.constant 0 : index
    %c0_43 = arith.constant 0 : index
    %76 = vector.load %arg7[%c0_42, %c0_43] : memref<16x1xf32, #tpu.memory_space<vmem>>, vector<16x1xf32>
    %77 = vector.broadcast %76 : vector<16x1xf32> to vector<16x256xf32>
    %78 = arith.addf %75, %77 : vector<16x256xf32>
    %cst_44 = arith.constant 0.00999999977 : f32
    %79 = vector.broadcast %cst_44 : f32 to vector<16x256xf32>
    %80 = arith.mulf %79, %78 : vector<16x256xf32>
    %81 = arith.maximumf %78, %80 : vector<16x256xf32>
    %82 = arith.truncf %81 : vector<16x256xf32> to vector<16x256xbf16>
    %c0_45 = arith.constant 0 : index
    %c0_46 = arith.constant 0 : index
    %c0_47 = arith.constant 0 : index
    %83 = vector.load %arg8[%c0_45, %c0_46, %c0_47] : memref<1x16x256xbf16, #tpu.memory_space<vmem>>, vector<1x16x256xbf16>
    %84 = vector.shape_cast %83 : vector<1x16x256xbf16> to vector<16x256xbf16>
    %85 = vector.shape_cast %82 : vector<16x256xbf16> to vector<1x16x256xbf16>
    tpu.vector_store %arg8[%c0_45, %c0_46, %c0_47], %85 {strides = array<i32>} : memref<1x16x256xbf16, #tpu.memory_space<vmem>>, vector<1x16x256xbf16>,
    return
  }
  func.func @transform_0(%arg0: i32) -> (i32, i32, i32) {
    %c0_i32 = arith.constant 0 : i32
    %c0_i32_0 = arith.constant 0 : i32
    %c0_i32_1 = arith.constant 0 : i32
    return %arg0, %c0_i32, %c0_i32_0 : i32, i32, i32
  }
  func.func @transform_1(%arg0: i32) -> (i32, i32) {
    %c0_i32 = arith.constant 0 : i32
    %c0_i32_0 = arith.constant 0 : i32
    %c0_i32_1 = arith.constant 0 : i32
    return %c0_i32, %c0_i32_0 : i32, i32
  }
  func.func @transform_2(%arg0: i32) -> (i32, i32) {
    %c0_i32 = arith.constant 0 : i32
    %c0_i32_0 = arith.constant 0 : i32
    %c0_i32_1 = arith.constant 0 : i32
    return %c0_i32, %c0_i32_0 : i32, i32
  }
  func.func @transform_3(%arg0: i32) -> (i32, i32, i32) {
    %c0_i32 = arith.constant 0 : i32
    %c0_i32_0 = arith.constant 0 : i32
    %c0_i32_1 = arith.constant 0 : i32
    %c0_i32_2 = arith.constant 0 : i32
    return %c0_i32, %c0_i32_0, %c0_i32_1 : i32, i32, i32
  }
  func.func @transform_4(%arg0: i32) -> (i32, i32) {
    %c0_i32 = arith.constant 0 : i32
    %c0_i32_0 = arith.constant 0 : i32
    %c0_i32_1 = arith.constant 0 : i32
    return %c0_i32, %c0_i32_0 : i32, i32
  }
  func.func @transform_5(%arg0: i32) -> (i32, i32) {
    %c0_i32 = arith.constant 0 : i32
    %c0_i32_0 = arith.constant 0 : i32
    %c0_i32_1 = arith.constant 0 : i32
    return %c0_i32, %c0_i32_0 : i32, i32
  }
  func.func @transform_6(%arg0: i32) -> (i32, i32) {
    %c0_i32 = arith.constant 0 : i32
    %c0_i32_0 = arith.constant 0 : i32
    %c0_i32_1 = arith.constant 0 : i32
    return %c0_i32, %c0_i32_0 : i32, i32
  }
  func.func @transform_7(%arg0: i32) -> (i32, i32, i32) {
    %c0_i32 = arith.constant 0 : i32
    %c0_i32_0 = arith.constant 0 : i32
    %c0_i32_1 = arith.constant 0 : i32
    return %arg0, %c0_i32, %c0_i32_0 : i32, i32, i32
  }
  func.func @transform_8(%arg0: i32) -> (i32, i32, i32) {
    %c0_i32 = arith.constant 0 : i32
    %c0_i32_0 = arith.constant 0 : i32
    %c0_i32_1 = arith.constant 0 : i32
    return %arg0, %c0_i32, %c0_i32_0 : i32, i32, i32
  }
}

</mosaic_0001>

<llo_original>
// kernel: tpu_custom_call.1
$region0: #{tpu_custom_call.1}
  #allocation0 [shape = 'u32[]', space=smem, size = 0x4, offset = 0x4, fixed_abs, tag = 'smem constant byte address 0x4 - core index']
  #allocation1 [shape = 'u32[72,128]{1,0:T(1,128)}', space=vmem, size = 0x9000, scoped, tag = 'internal scratch']
  #allocation2 [shape = 'bf16[4,290]{1,0:T(4,128)(2,1)}', space=vmem, size = 0xc00, scoped, tag = 'scratch operand']
  %s0 = inlined_call_operand.vmem [shape: bf16[2,8,256], index: 0, kind: input, shape index: {}]
  %s1 = inlined_call_operand.vmem [shape: bf16[4,8], index: 1, kind: input, shape index: {}]
  %s2 = inlined_call_operand.vmem [shape: f32[4,1], index: 2, kind: input, shape index: {}]
  %s3 = inlined_call_operand.vmem [shape: bf16[3,4,12], index: 3, kind: input, shape index: {}]
  %s4 = inlined_call_operand.vmem [shape: f32[4,1], index: 4, kind: input, shape index: {}]
  %s5 = inlined_call_operand.hbm [shape: bf16[16,12], index: 5, kind: input, shape index: {}]
  %s6 = inlined_call_operand.vmem [shape: f32[16,1], index: 6, kind: input, shape index: {}]
  %s7 = inlined_call_operand.hbm [shape: bf16[2,16,256], index: 7, kind: output, shape index: {0}]
  %s8 = inlined_call_operand.hbm [shape: bf16[2,4,256], index: 8, kind: output, shape index: {1}]
  %9 = xla_tuple %s7, %s8
  %s10 = sld [smem:[#allocation0]]
  $region73: #{tpu_custom_call.1} parent=0
    _
  %s12 = ssub.s32 1, %s10
  %s13 = scalar_select 0, %s12, %s10
  $region1: #{tpu_custom_call.1} parent=0
    #allocation3 [shape = 'u8[4096]{0}', space=vmem, size = 0x1000, scoped, tag = 'input window, operand 5, single buffered']
    #allocation4 [shape = 's32[2]{0}', space=sflag, size = 0x8, scoped, tag = 'scoped memory for tpu_custom_call.1']
    #allocation5 [shape = 's32[2]{0}', space=sflag, size = 0x8, scoped, tag = 'scoped memory for tpu_custom_call.1']
    #allocation6 [shape = 'u8[16384]{0}', space=vmem, size = 0x4000, scoped, tag = 'output window, operand 0']
    #allocation7 [shape = 'u8[4096]{0}', space=vmem, size = 0x1000, scoped, tag = 'output window, operand 1']
    #allocation8 [shape = 's32[2]{0}', space=sflag, size = 0x8, scoped, tag = 'scoped memory for tpu_custom_call.1']
    %14 = vsyncpa [#allocation4], 0
    %15 = vsyncpa [#allocation5], 0
    %s16 = scalar_lea.sflag [#allocation5], 1
    %17 = vsyncpa %s16, 0
    %18 = vsyncpa [#allocation8], 0
    %s19 = scalar_lea.sflag [#allocation8], 1
    %20 = vsyncpa %s19, 0
    loop: start=0, step=1, limit=4
    $region2: #{tpu_custom_call.1} parent=1 // loop_pre_header
      _
    $region3: #{tpu_custom_call.1} parent=1 // loop_header
      %s22 = sphi 0, %s26
      %p23 = scmp.ge.s32.totalorder %s22, 4
      %s32 = sphi 0, %s34
      %s35 = sphi 0, %s32
      %s36 = sphi 0, %s35
      %s52 = sphi 0, %s36
      %s56 = sphi 0, %s56
      %s58 = sphi 0, %s56
      %s59 = sphi 0, %s58
      %s73 = sphi 0, %s59
      %s77 = sphi 0, %s77
      %s79 = sphi 0, %s77
      %s80 = sphi 0, %s79
      %s94 = sphi 0, %s80
      %s98 = sphi 0, %s98
      %s100 = sphi 0, %s98
      %s101 = sphi 0, %s100
      %s115 = sphi 0, %s101
      %s119 = sphi 0, %s119
      %s121 = sphi 0, %s119
      %s122 = sphi 0, %s121
      %s136 = sphi 0, %s122
      %s140 = sphi 0, %s140
      %s142 = sphi 0, %s140
      %s143 = sphi 0, %s142
      %s157 = sphi 0, %s143
      %s161 = sphi 0, %s161
      %s163 = sphi 0, %s161
      %s164 = sphi 0, %s163
      %s178 = sphi 0, %s164
      %s184 = sphi 0, %s186
      %s187 = sphi 0, %s184
      %s188 = sphi 0, %s187
      %s204 = sphi 0, %s188
      %s210 = sphi 0, %s212
      %s213 = sphi 0, %s210
      %s214 = sphi 0, %s213
      %s230 = sphi 0, %s214
    $region4: #{tpu_custom_call.1} parent=1 // loop_header_branch
      %25 = sbr.rel (%p23) target = $region8
    $region5: #{tpu_custom_call.1} parent=1 // loop_body
      %s27 = ssub.s32 %s22, 1
      %s28 = ssub.s32 %s22, 2
      %s29 = sadd.s32 %s22, 1
      %s30 = ssub.s32 %s22, %s29
      %p31 = scmp.eq.s32.totalorder %s30, 0
      %s33 = sadd.s32 %s32, 1
      %s34 = scalar_select %p31, %s32, %s33
      %p37 = pneg %p31
      %p38 = scmp.eq.s32.totalorder %s22, 1
      %p39 = por %p37, %p38
      %p40 = scmp.ne.s32.totalorder %s32, %s35
      %p41 = scmp.eq.s32.totalorder %s22, 0
      %p42 = por %p40, %p41
      %p43 = scmp.ne.s32.totalorder %s32, %s35
      %p44 = scmp.eq.s32.totalorder %s27, 1
      %p45 = por %p43, %p44
      %p46 = scmp.ne.s32.totalorder %s35, %s36
      %p47 = scmp.eq.s32.totalorder %s27, 0
      %p48 = por %p46, %p47
      %p49 = scmp.ne.s32.totalorder %s35, %s36
      %p50 = scmp.eq.s32.totalorder %s28, 1
      %p51 = por %p49, %p50
      %p53 = scmp.ne.s32.totalorder %s36, %s52
      %p54 = scmp.eq.s32.totalorder %s28, 0
      %p55 = por %p53, %p54
      %s57 = sadd.s32 %s56, 1
      %p60 = scmp.eq.s32.totalorder %s22, 1
      %p61 = scmp.ne.s32.totalorder %s56, %s58
      %p62 = scmp.eq.s32.totalorder %s22, 0
      %p63 = por %p61, %p62
      %p64 = scmp.ne.s32.totalorder %s56, %s58
      %p65 = scmp.eq.s32.totalorder %s27, 1
      %p66 = por %p64, %p65
      %p67 = scmp.ne.s32.totalorder %s58, %s59
      %p68 = scmp.eq.s32.totalorder %s27, 0
      %p69 = por %p67, %p68
      %p70 = scmp.ne.s32.totalorder %s58, %s59
      %p71 = scmp.eq.s32.totalorder %s28, 1
      %p72 = por %p70, %p71
      %p74 = scmp.ne.s32.totalorder %s59, %s73
      %p75 = scmp.eq.s32.totalorder %s28, 0
      %p76 = por %p74, %p75
      %s78 = sadd.s32 %s77, 1
      %p81 = scmp.eq.s32.totalorder %s22, 1
      %p82 = scmp.ne.s32.totalorder %s77, %s79
      %p83 = scmp.eq.s32.totalorder %s22, 0
      %p84 = por %p82, %p83
      %p85 = scmp.ne.s32.totalorder %s77, %s79
      %p86 = scmp.eq.s32.totalorder %s27, 1
      %p87 = por %p85, %p86
      %p88 = scmp.ne.s32.totalorder %s79, %s80
      %p89 = scmp.eq.s32.totalorder %s27, 0
      %p90 = por %p88, %p89
      %p91 = scmp.ne.s32.totalorder %s79, %s80
      %p92 = scmp.eq.s32.totalorder %s28, 1
      %p93 = por %p91, %p92
      %p95 = scmp.ne.s32.totalorder %s80, %s94
      %p96 = scmp.eq.s32.totalorder %s28, 0
      %p97 = por %p95, %p96
      %s99 = sadd.s32 %s98, 1
      %p102 = scmp.eq.s32.totalorder %s22, 1
      %p103 = scmp.ne.s32.totalorder %s98, %s100
      %p104 = scmp.eq.s32.totalorder %s22, 0
      %p105 = por %p103, %p104
      %p106 = scmp.ne.s32.totalorder %s98, %s100
      %p107 = scmp.eq.s32.totalorder %s27, 1
      %p108 = por %p106, %p107
      %p109 = scmp.ne.s32.totalorder %s100, %s101
      %p110 = scmp.eq.s32.totalorder %s27, 0
      %p111 = por %p109, %p110
      %p112 = scmp.ne.s32.totalorder %s100, %s101
      %p113 = scmp.eq.s32.totalorder %s28, 1
      %p114 = por %p112, %p113
      %p116 = scmp.ne.s32.totalorder %s101, %s115
      %p117 = scmp.eq.s32.totalorder %s28, 0
      %p118 = por %p116, %p117
      %s120 = sadd.s32 %s119, 1
      %p123 = scmp.eq.s32.totalorder %s22, 1
      %p124 = scmp.ne.s32.totalorder %s119, %s121
      %p125 = scmp.eq.s32.totalorder %s22, 0
      %p126 = por %p124, %p125
      %p127 = scmp.ne.s32.totalorder %s119, %s121
      %p128 = scmp.eq.s32.totalorder %s27, 1
      %p129 = por %p127, %p128
      %p130 = scmp.ne.s32.totalorder %s121, %s122
      %p131 = scmp.eq.s32.totalorder %s27, 0
      %p132 = por %p130, %p131
      %p133 = scmp.ne.s32.totalorder %s121, %s122
      %p134 = scmp.eq.s32.totalorder %s28, 1
      %p135 = por %p133, %p134
      %p137 = scmp.ne.s32.totalorder %s122, %s136
      %p138 = scmp.eq.s32.totalorder %s28, 0
      %p139 = por %p137, %p138
      %s141 = sadd.s32 %s140, 1
      %p144 = scmp.eq.s32.totalorder %s22, 1
      %p145 = scmp.ne.s32.totalorder %s140, %s142
      %p146 = scmp.eq.s32.totalorder %s22, 0
      %p147 = por %p145, %p146
      %p148 = scmp.ne.s32.totalorder %s140, %s142
      %p149 = scmp.eq.s32.totalorder %s27, 1
      %p150 = por %p148, %p149
      %p151 = scmp.ne.s32.totalorder %s142, %s143
      %p152 = scmp.eq.s32.totalorder %s27, 0
      %p153 = por %p151, %p152
      %p154 = scmp.ne.s32.totalorder %s142, %s143
      %p155 = scmp.eq.s32.totalorder %s28, 1
      %p156 = por %p154, %p155
      %p158 = scmp.ne.s32.totalorder %s143, %s157
      %p159 = scmp.eq.s32.totalorder %s28, 0
      %p160 = por %p158, %p159
      %s162 = sadd.s32 %s161, 1
      %p165 = scmp.eq.s32.totalorder %s22, 1
      %p166 = scmp.ne.s32.totalorder %s161, %s163
      %p167 = scmp.eq.s32.totalorder %s22, 0
      %p168 = por %p166, %p167
      %p169 = scmp.ne.s32.totalorder %s161, %s163
      %p170 = scmp.eq.s32.totalorder %s27, 1
      %p171 = por %p169, %p170
      %p172 = scmp.ne.s32.totalorder %s163, %s164
      %p173 = scmp.eq.s32.totalorder %s27, 0
      %p174 = por %p172, %p173
      %p175 = scmp.ne.s32.totalorder %s163, %s164
      %p176 = scmp.eq.s32.totalorder %s28, 1
      %p177 = por %p175, %p176
      %p179 = scmp.ne.s32.totalorder %s164, %s178
      %p180 = scmp.eq.s32.totalorder %s28, 0
      %p181 = por %p179, %p180
      %s182 = ssub.s32 %s22, %s29
      %p183 = scmp.eq.s32.totalorder %s182, 0
      %s185 = sadd.s32 %s184, 1
      %s186 = scalar_select %p183, %s184, %s185
      %p189 = pneg %p183
      %p190 = scmp.eq.s32.totalorder %s22, 1
      %p191 = por %p189, %p190
      %p192 = scmp.ne.s32.totalorder %s184, %s187
      %p193 = scmp.eq.s32.totalorder %s22, 0
      %p194 = por %p192, %p193
      %p195 = scmp.ne.s32.totalorder %s184, %s187
      %p196 = scmp.eq.s32.totalorder %s27, 1
      %p197 = por %p195, %p196
      %p198 = scmp.ne.s32.totalorder %s187, %s188
      %p199 = scmp.eq.s32.totalorder %s27, 0
      %p200 = por %p198, %p199
      %p201 = scmp.ne.s32.totalorder %s187, %s188
      %p202 = scmp.eq.s32.totalorder %s28, 1
      %p203 = por %p201, %p202
      %p205 = scmp.ne.s32.totalorder %s188, %s204
      %p206 = scmp.eq.s32.totalorder %s28, 0
      %p207 = por %p205, %p206
      %s208 = ssub.s32 %s22, %s29
      %p209 = scmp.eq.s32.totalorder %s208, 0
      %s211 = sadd.s32 %s210, 1
      %s212 = scalar_select %p209, %s210, %s211
      %p215 = pneg %p209
      %p216 = scmp.eq.s32.totalorder %s22, 1
      %p217 = por %p215, %p216
      %p218 = scmp.ne.s32.totalorder %s210, %s213
      %p219 = scmp.eq.s32.totalorder %s22, 0
      %p220 = por %p218, %p219
      %p221 = scmp.ne.s32.totalorder %s210, %s213
      %p222 = scmp.eq.s32.totalorder %s27, 1
      %p223 = por %p221, %p222
      %p224 = scmp.ne.s32.totalorder %s213, %s214
      %p225 = scmp.eq.s32.totalorder %s27, 0
      %p226 = por %p224, %p225
      %p227 = scmp.ne.s32.totalorder %s213, %s214
      %p228 = scmp.eq.s32.totalorder %s28, 1
      %p229 = por %p227, %p228
      %p231 = scmp.ne.s32.totalorder %s214, %s230
      %p232 = scmp.eq.s32.totalorder %s28, 0
      %p233 = por %p231, %p232
      %p234 = scmp.le.s32.totalorder 1, %s22
      %p235 = scmp.lt.s32.totalorder %s22, 3
      %p236 = pnand %p234, %p235
      %p237 = pneg %p236
      // Predicated region
      $region9: #{tpu_custom_call.1} parent=5 // pred_check
        _
      $region10: #{tpu_custom_call.1} parent=5 // pred_check_branch
        %239 = sbr.rel (%p236) target = $region12
      $region11: #{tpu_custom_call.1} parent=5 // pred_region
        %s240 = ssub.s32 %s22, 1
        // Predicated region
        $region13: #{tpu_custom_call.1} parent=11 // pred_check
          %p241 = pneg %p69
        $region14: #{tpu_custom_call.1} parent=11 // pred_check_branch
          %243 = sbr.rel (%p241) target = $region16
        $region15: #{tpu_custom_call.1} parent=11 // pred_region
          _
        $region16: #{tpu_custom_call.1} parent=11 // pred_fallthru
          _
        // Predicated region
        $region17: #{tpu_custom_call.1} parent=11 // pred_check
          %p244 = pneg %p90
        $region18: #{tpu_custom_call.1} parent=11 // pred_check_branch
          %246 = sbr.rel (%p244) target = $region20
        $region19: #{tpu_custom_call.1} parent=11 // pred_region
          _
        $region20: #{tpu_custom_call.1} parent=11 // pred_fallthru
          _
        // Predicated region
        $region21: #{tpu_custom_call.1} parent=11 // pred_check
          %p247 = pneg %p111
        $region22: #{tpu_custom_call.1} parent=11 // pred_check_branch
          %249 = sbr.rel (%p247) target = $region24
        $region23: #{tpu_custom_call.1} parent=11 // pred_region
          _
        $region24: #{tpu_custom_call.1} parent=11 // pred_fallthru
          _
        // Predicated region
        $region25: #{tpu_custom_call.1} parent=11 // pred_check
          %p250 = pneg %p132
        $region26: #{tpu_custom_call.1} parent=11 // pred_check_branch
          %252 = sbr.rel (%p250) target = $region28
        $region27: #{tpu_custom_call.1} parent=11 // pred_region
          _
        $region28: #{tpu_custom_call.1} parent=11 // pred_fallthru
          _
        // Predicated region
        $region29: #{tpu_custom_call.1} parent=11 // pred_check
          %p253 = pneg %p153
        $region30: #{tpu_custom_call.1} parent=11 // pred_check_branch
          %255 = sbr.rel (%p253) target = $region32
        $region31: #{tpu_custom_call.1} parent=11 // pred_region
          %257 = vsyncadd [#allocation4], 0
          %s258 = sshll.u32 %s5, 4
          %s259 = int_to_ptr.hbm [resolvable:$true] %s258
          %s260 = sshll.u32 [#allocation3], 4
          %s261 = int_to_ptr.vmem [resolvable:$true] %s260
          %266 = dma.hbm_to_vmem [thread:$0]  %s259, 128, %s261, [#allocation4], 64, 64, 4
        $region32: #{tpu_custom_call.1} parent=11 // pred_fallthru
          _
        // Predicated region
        $region33: #{tpu_custom_call.1} parent=11 // pred_check
          %p267 = pneg %p174
        $region34: #{tpu_custom_call.1} parent=11 // pred_check_branch
          %269 = sbr.rel (%p267) target = $region36
        $region35: #{tpu_custom_call.1} parent=11 // pred_region
          _
        $region36: #{tpu_custom_call.1} parent=11 // pred_fallthru
          _
      $region12: #{tpu_custom_call.1} parent=5 // pred_fallthru
        _
      %p270 = scmp.lt.s32.totalorder %s22, 2
      // Predicated region
      $region37: #{tpu_custom_call.1} parent=5 // pred_check
        %p271 = pneg %p270
      $region38: #{tpu_custom_call.1} parent=5 // pred_check_branch
        %273 = sbr.rel (%p271) target = $region40
      $region39: #{tpu_custom_call.1} parent=5 // pred_region
        // Predicated region
        $region41: #{tpu_custom_call.1} parent=39 // pred_check
          %p274 = pneg %p42
        $region42: #{tpu_custom_call.1} parent=39 // pred_check_branch
          %276 = sbr.rel (%p274) target = $region44
        $region43: #{tpu_custom_call.1} parent=39 // pred_region
          %p277 = scmp.lt.s32.totalorder %s22, 1
          %s278 = scalar_select %p277, %s22, 1
          %s279 = smul.addr %s278, 2
          %s280 = smul.addr %s279, 4
          %s281 = scalar_lea.vmem %s0, %s280
        $region44: #{tpu_custom_call.1} parent=39 // pred_fallthru
          _
      $region40: #{tpu_custom_call.1} parent=5 // pred_fallthru
        _
      %p282 = scmp.le.s32.totalorder 1, %s22
      %p283 = scmp.lt.s32.totalorder %s22, 3
      %p284 = pnand %p282, %p283
      %p285 = pneg %p284
      // Predicated region
      $region45: #{tpu_custom_call.1} parent=5 // pred_check
        _
      $region46: #{tpu_custom_call.1} parent=5 // pred_check_branch
        %287 = sbr.rel (%p284) target = $region48
      $region47: #{tpu_custom_call.1} parent=5 // pred_region
        %s288 = ssub.s32 %s22, 1
        // Predicated region
        $region49: #{tpu_custom_call.1} parent=47 // pred_check
          %p289 = pneg %p153
        $region50: #{tpu_custom_call.1} parent=47 // pred_check_branch
          %291 = sbr.rel (%p289) target = $region52
        $region51: #{tpu_custom_call.1} parent=47 // pred_region
          %293 = dma.done [#allocation4], 128
        $region52: #{tpu_custom_call.1} parent=47 // pred_fallthru
          _
        %p294 = scmp.lt.s32.totalorder %s27, 1
        %s295 = scalar_select %p294, %s27, 1
        %s296 = smul.addr %s295, 2
        %s297 = smul.addr %s296, 4
        %s298 = scalar_lea.vmem %s0, %s297
        %p299 = pneg %p48
        %p300 = pneg %p45
        %p301 = pneg %p69
        %p302 = pneg %p66
        %p303 = pneg %p90
        %p304 = pneg %p87
        %p305 = pneg %p111
        %p306 = pneg %p108
        %p307 = pneg %p132
        %p308 = pneg %p129
        %p309 = pneg %p153
        %p310 = pneg %p150
        %p311 = pneg %p174
        %p312 = pneg %p171
        %p313 = pneg %p200
        %p314 = pneg %p197
        %s315 = sand.u32 %s187, 1
        %s316 = scalar_lea.sflag [#allocation5], %s315
        %s317 = sand.u32 %s187, 1
        %s318 = smul.addr %s317, 16
        %s319 = scalar_lea.vmem [#allocation6], %s318
        %p320 = pneg %p226
        %p321 = pneg %p223
        %s322 = sand.u32 %s213, 1
        %s323 = scalar_lea.sflag [#allocation8], %s322
        %s324 = sand.u32 %s213, 1
        %s325 = smul.addr %s324, 4
        %s326 = scalar_lea.vmem [#allocation7], %s325
        %p327 = scmp.lt.s32.totalorder %s27, 1
        %s328 = scalar_select %p327, %s27, 1
        %s329 = smul.addr %s328, 2
        %s330 = smul.addr %s329, 4
        %s331 = scalar_lea.vmem %s0, %s330
        %v333 = vld [vmem:[%s331] sm:$0xff]
        %v334 = vld [vmem:[%s1] sm:$0x3]
        %v335 = vld [vmem:[%s2] sm:$0xf]
        %337 = vset.pattern.permute.xlu0 0
        %338 = vperm.xlu0 %337, %v335
        %v339 = vpop.permute.xlu0 %338
        %v342 = vunpack.c.l.b16 %v333
        %v343 = vunpack.c.h.b16 %v333
        %v344 = vpack.c.b16 %v342, %v342
        %v345 = vpack.c.b16 %v343, %v343
        %vm346 = vcmask 64512
        %v348 = vsel %vm346, %v334, 0
        %vm350 = vcmask 1043456
        %v352 = vsel %vm350, %v344, 0
        %v355 = vsel %vm350, %v345, 0
        %357 = vmatpush.bf16.msra.mxu0 0
        %358 = vmatpush.bf16.msra.mxu0 0
        %359 = vmatpush.bf16.msra.mxu0 0
        %360 = vmatpush.bf16.msra.mxu0 0
        %361 = vmatpush.bf16.msra.mxu0 0
        %362 = vmatpush.bf16.msra.mxu0 0
        %363 = vmatpush.bf16.msra.mxu0 0
        %364 = vmatpush.bf16.msra.mxu0 %v352
        %365 = vmatmul.bf16.gmra.mxu0 %v348
        %v366 = vpop.f32.mrf.mxu0
        %v367 = vadd.f32 %v339, %v366
        %v368 = vpop.f32.mrf.mxu0
        %369 = vdwg.mxu0
        %370 = vmatpush.bf16.msra.mxu0 0
        %371 = vmatpush.bf16.msra.mxu0 0
        %372 = vmatpush.bf16.msra.mxu0 0
        %373 = vmatpush.bf16.msra.mxu0 0
        %374 = vmatpush.bf16.msra.mxu0 0
        %375 = vmatpush.bf16.msra.mxu0 0
        %376 = vmatpush.bf16.msra.mxu0 0
        %377 = vmatpush.bf16.msra.mxu0 %v355
        %378 = vmatmul.bf16.gmra.mxu0 %v348
        %v379 = vpop.f32.mrf.mxu0
        %v380 = vadd.f32 %v339, %v379
        %v381 = vpop.f32.mrf.mxu0
        %382 = vdwg.mxu0
        %v383 = vmul.f32 %v367, 0.01
        %v384 = vmul.f32 %v380, 0.01
        %v385 = vmax.f32 %v367, %v383
        %v386 = vmax.f32 %v380, %v384
        %vm387 = vcmask 132096
        %388 = vst.msk [vmem:[#allocation2] sm:$0x3] %vm387, 0
        %vm389 = vcmask 271496
        %390 = vst.msk [vmem:[#allocation2 + $0x4] sm:$0x3] %vm389, 0
        %v391 = vpack.c.bf16 %v386, %v385
        %v393 = vrot.slane %v391, 2
        %vm394 = vcmask 1041408
        %v397 = vsel %vm394, %v391, %v393
        %399 = vrot.lane.b32.xlu0 %v397, 17
        %v400 = vpop.permute.xlu0 %399
        %v401 = vrot.slane %v400, 6
        %vm402 = vcmask 138240
        %v403 = vsel %vm402, %v401, %v400
        %vm405 = vcmask 1041544
        %vm406 = vcmask 1043458
        %vm407 = vmor %vm406, %vm405
        %vm408 = vcmask 136196
        %vm409 = vmor %vm408, %vm407
        %410 = vst.msk [vmem:[#allocation2] sm:$0x3f] %vm409, %v403
        %v411 = vld [vmem:[#allocation2] sm:$0x3f]
        %413 = vst [vmem:[#allocation1] ss:$4 sm:$0xff] %v411
        %v414 = vld.sshfl [vmem:[#allocation1] sm:$0xff pattern:$0x73625140]
        %v415 = vld.sshfl [vmem:[#allocation1 + $0x8] sm:$0xff pattern:$0x73625140]
        %v416 = vld.sshfl [vmem:[#allocation1 + $0x10] sm:$0xff pattern:$0x73625140]
        %s417 = scalar_lea.vmem [#allocation1], 1
        %418 = vst [vmem:[%s417] ss:$4 sm:$0xff] %v411
        %v419 = vld.sshfl [vmem:[#allocation1] sm:$0xff pattern:$0x73625140]
        %v421 = vld.sshfl [vmem:[#allocation1 + $0x8] sm:$0xff pattern:$0x73625140]
        %v423 = vld.sshfl [vmem:[#allocation1 + $0x10] sm:$0xff pattern:$0x73625140]
        %425 = vrot.lane.b32.xlu0 %v419, 112
        %v426 = vpop.permute.xlu0 %425
        %427 = vrot.lane.b32.xlu0 %v421, 112
        %v428 = vpop.permute.xlu0 %427
        %429 = vrot.lane.b32.xlu0 %v423, 112
        %v430 = vpop.permute.xlu0 %429
        %vm431 = vcmask 916480
        %v432 = vsel %vm431, %v426, %v428
        %v433 = vsel %vm431, %v428, %v430
        %s434 = scalar_lea.vmem [#allocation1], 2
        %435 = vst [vmem:[%s434] ss:$4 sm:$0xff] %v411
        %v436 = vld.sshfl [vmem:[#allocation1] sm:$0xff pattern:$0x73625140]
        %v438 = vld.sshfl [vmem:[#allocation1 + $0x8] sm:$0xff pattern:$0x73625140]
        %v440 = vld.sshfl [vmem:[#allocation1 + $0x10] sm:$0xff pattern:$0x73625140]
        %442 = vrot.lane.b32.xlu0 %v436, 96
        %v443 = vpop.permute.xlu0 %442
        %444 = vrot.lane.b32.xlu0 %v438, 96
        %v445 = vpop.permute.xlu0 %444
        %446 = vrot.lane.b32.xlu0 %v440, 96
        %v447 = vpop.permute.xlu0 %446
        %vm448 = vcmask 785408
        %v449 = vsel %vm448, %v443, %v445
        %v450 = vsel %vm448, %v445, %v447
        %v452 = vsel %vm394, %v414, %v432
        %v454 = vsel %vm394, %v415, %v433
        %v456 = vsel %vm394, %v416, %v430
        %v458 = vsel %vm350, %v452, %v449
        %v460 = vsel %vm350, %v454, %v450
        %v462 = vsel %vm350, %v456, %v447
        %v463 = vlaneseq
        %v464 = vand.u32 %v463, 127
        %v465 = vadd.s32 %v464, 128
        %vm466 = vcmp.lt.s32.totalorder %v464, 0
        %v467 = vsub.s32 0, %v464
        %v468 = vsel %vm466, %v467, %v464
        %v469 = vshrl.u32 %v468, 4
        %v470 = vand.u32 %v468, 15
        %v471 = vsub.s32 0, %v470
        %v472 = vsel %vm466, %v471, %v470
        %vm473 = vcmp.lt.s32.totalorder %v465, 0
        %v474 = vsub.s32 0, %v465
        %v475 = vsel %vm473, %v474, %v465
        %v476 = vshrl.u32 %v475, 4
        %v477 = vand.u32 %v475, 15
        %v478 = vsub.s32 0, %v477
        %v479 = vsel %vm473, %v478, %v477
        %vm480 = vcmp.ne.s32.totalorder %v472, 0
        %vm481 = vcmp.ne.s32.totalorder %v479, 0
        %vm482 = vcmp.lt.s32.totalorder %v472, 0
        %vm483 = vcmp.lt.s32.totalorder %v479, 0
        %vm484 = vmand %vm482, %vm480
        %vm485 = vmand %vm483, %vm481
        %v486 = vadd.s32 %v472, 16
        %v487 = vadd.s32 %v479, 16
        %v488 = vsel %vm484, %v486, %v472
        %v489 = vsel %vm485, %v487, %v479
        %s490 = scalar_lea.vmem %s3, 2
        %v491 = vld [vmem:[%s490] sm:$0x3]
        %v492 = vld [vmem:[%s3] sm:$0x3]
        %vm493 = vcmask 97280
        %v495 = vsel %vm493, %v492, 0
        %vm497 = vcmask 1045504
        %v498 = vsel %vm497, %v458, 0
        %v500 = vsel %vm497, %v460, 0
        %502 = vmatpush.bf16.msra.mxu0 0
        %503 = vmatpush.bf16.msra.mxu0 0
        %504 = vmatpush.bf16.msra.mxu0 0
        %505 = vmatpush.bf16.msra.mxu0 0
        %506 = vmatpush.bf16.msra.mxu0 0
        %507 = vmatpush.bf16.msra.mxu0 0
        %508 = vmatpush.bf16.msra.mxu0 0
        %509 = vmatpush.bf16.msra.mxu0 %v498
        %510 = vmatmul.bf16.gmra.mxu0 %v495
        %v511 = vpop.f32.mrf.mxu0
        %v512 = vadd.f32 0.0, %v511
        %v513 = vpop.f32.mrf.mxu0
        %514 = vdwg.mxu0
        %515 = vmatpush.bf16.msra.mxu0 0
        %516 = vmatpush.bf16.msra.mxu0 0
        %517 = vmatpush.bf16.msra.mxu0 0
        %518 = vmatpush.bf16.msra.mxu0 0
        %519 = vmatpush.bf16.msra.mxu0 0
        %520 = vmatpush.bf16.msra.mxu0 0
        %521 = vmatpush.bf16.msra.mxu0 0
        %522 = vmatpush.bf16.msra.mxu0 %v500
        %523 = vmatmul.bf16.gmra.mxu0 %v495
        %v524 = vpop.f32.mrf.mxu0
        %v525 = vadd.f32 0.0, %v524
        %v526 = vpop.f32.mrf.mxu0
        %527 = vdwg.mxu0
        %vm528 = vcmp.ge.s32.totalorder %v488, 1
        %vm529 = vcmp.ge.s32.totalorder %v489, 1
        %v530 = vsel %vm528, 1, 0
        %v531 = vsel %vm529, 1, 0
        %vm532 = vcmp.eq.s32.totalorder %v530, 1
        %vm533 = vcmp.eq.s32.totalorder %v531, 1
        %v534 = vsel %vm532, %v512, 0.0
        %v535 = vsel %vm533, %v525, 0.0
        %539 = vrot.lane.b32.xlu0 %v458, 127
        %v540 = vpop.permute.xlu0 %539
        %541 = vrot.lane.b32.xlu0 %v460, 127
        %v542 = vpop.permute.xlu0 %541
        %543 = vrot.lane.b32.xlu0 %v462, 127
        %v544 = vpop.permute.xlu0 %543
        %vm545 = vcmask 1039360
        %v546 = vsel %vm545, %v540, %v542
        %v547 = vsel %vm545, %v542, %v544
        %v549 = vsel %vm493, %v491, 0
        %v552 = vsel %vm497, %v546, 0
        %v555 = vsel %vm497, %v547, 0
        %557 = vmatpush.bf16.msra.mxu0 0
        %558 = vmatpush.bf16.msra.mxu0 0
        %559 = vmatpush.bf16.msra.mxu0 0
        %560 = vmatpush.bf16.msra.mxu0 0
        %561 = vmatpush.bf16.msra.mxu0 0
        %562 = vmatpush.bf16.msra.mxu0 0
        %563 = vmatpush.bf16.msra.mxu0 0
        %564 = vmatpush.bf16.msra.mxu0 %v552
        %565 = vmatmul.bf16.gmra.mxu0 %v549
        %v566 = vpop.f32.mrf.mxu0
        %v567 = vadd.f32 %v534, %v566
        %v568 = vpop.f32.mrf.mxu0
        %569 = vdwg.mxu0
        %570 = vmatpush.bf16.msra.mxu0 0
        %571 = vmatpush.bf16.msra.mxu0 0
        %572 = vmatpush.bf16.msra.mxu0 0
        %573 = vmatpush.bf16.msra.mxu0 0
        %574 = vmatpush.bf16.msra.mxu0 0
        %575 = vmatpush.bf16.msra.mxu0 0
        %576 = vmatpush.bf16.msra.mxu0 0
        %577 = vmatpush.bf16.msra.mxu0 %v555
        %578 = vmatmul.bf16.gmra.mxu0 %v549
        %v579 = vpop.f32.mrf.mxu0
        %v580 = vadd.f32 %v535, %v579
        %v581 = vpop.f32.mrf.mxu0
        %582 = vdwg.mxu0
        %s583 = scalar_lea.vmem %s3, 4
        %v584 = vld [vmem:[%s583] sm:$0x3]
        %585 = vrot.lane.b32.xlu0 %v458, 126
        %v586 = vpop.permute.xlu0 %585
        %587 = vrot.lane.b32.xlu0 %v460, 126
        %v588 = vpop.permute.xlu0 %587
        %589 = vrot.lane.b32.xlu0 %v462, 126
        %v590 = vpop.permute.xlu0 %589
        %vm591 = vcmask 1031168
        %v592 = vsel %vm591, %v586, %v588
        %v593 = vsel %vm591, %v588, %v590
        %v595 = vsel %vm493, %v584, 0
        %v598 = vsel %vm497, %v592, 0
        %v601 = vsel %vm497, %v593, 0
        %603 = vmatpush.bf16.msra.mxu0 0
        %604 = vmatpush.bf16.msra.mxu0 0
        %605 = vmatpush.bf16.msra.mxu0 0
        %606 = vmatpush.bf16.msra.mxu0 0
        %607 = vmatpush.bf16.msra.mxu0 0
        %608 = vmatpush.bf16.msra.mxu0 0
        %609 = vmatpush.bf16.msra.mxu0 0
        %610 = vmatpush.bf16.msra.mxu0 %v598
        %611 = vmatmul.bf16.gmra.mxu0 %v595
        %v612 = vpop.f32.mrf.mxu0
        %v613 = vadd.f32 0.0, %v612
        %v614 = vpop.f32.mrf.mxu0
        %615 = vdwg.mxu0
        %616 = vmatpush.bf16.msra.mxu0 0
        %617 = vmatpush.bf16.msra.mxu0 0
        %618 = vmatpush.bf16.msra.mxu0 0
        %619 = vmatpush.bf16.msra.mxu0 0
        %620 = vmatpush.bf16.msra.mxu0 0
        %621 = vmatpush.bf16.msra.mxu0 0
        %622 = vmatpush.bf16.msra.mxu0 0
        %623 = vmatpush.bf16.msra.mxu0 %v601
        %624 = vmatmul.bf16.gmra.mxu0 %v595
        %v625 = vpop.f32.mrf.mxu0
        %v626 = vadd.f32 0.0, %v625
        %v627 = vpop.f32.mrf.mxu0
        %628 = vdwg.mxu0
        %vm629 = vcmp.le.s32.totalorder %v488, 14
        %vm630 = vcmp.le.s32.totalorder %v489, 14
        %v631 = vsel %vm629, 1, 0
        %v632 = vsel %vm630, 1, 0
        %vm633 = vcmp.eq.s32.totalorder %v631, 1
        %vm634 = vcmp.eq.s32.totalorder %v632, 1
        %v635 = vsel %vm633, %v613, 0.0
        %v636 = vsel %vm634, %v626, 0.0
        %v637 = vadd.f32 %v567, %v635
        %v638 = vadd.f32 %v580, %v636
        %v639 = vld [vmem:[%s4] sm:$0xf]
        %641 = vset.pattern.permute.xlu0 0
        %642 = vperm.xlu0 %641, %v639
        %v643 = vpop.permute.xlu0 %642
        %v645 = vadd.f32 %v637, %v643
        %v646 = vadd.f32 %v638, %v643
        %v647 = vmul.f32 %v645, 0.01
        %v648 = vmul.f32 %v646, 0.01
        %v649 = vmax.f32 %v645, %v647
        %v650 = vmax.f32 %v646, %v648
        %v651 = vpack.c.bf16 %v650, %v649
        %v653 = vrot.slane %v651, 2
        %v656 = vsel %vm394, %v651, %v653
        %658 = vst [vmem:[%s326] sm:$0xf] %v656
        %v659 = vunpack.c.l.b16 %v651
        %v660 = vunpack.c.h.b16 %v651
        %v661 = vpack.c.b16 %v659, %v659
        %v662 = vpack.c.b16 %v660, %v660
        %v663 = vrot.slane %v344, 6
        %v664 = vrot.slane %v345, 6
        %v667 = vsel %vm394, %v661, %v663
        %v670 = vsel %vm394, %v662, %v664
        %v671 = vld [vmem:[#allocation3] sm:$0xf]
        %v672 = vld [vmem:[#allocation3 + $0x4] sm:$0xf]
        %v673 = vld [vmem:[%s6] sm:$0xff]
        %v674 = vld [vmem:[%s6 + $0x8] sm:$0xff]
        %676 = vset.pattern.permute.xlu0 0
        %677 = vperm.xlu0 %676, %v673
        %v678 = vpop.permute.xlu0 %677
        %681 = vset.pattern.permute.xlu0 0
        %682 = vperm.xlu0 %681, %v674
        %v683 = vpop.permute.xlu0 %682
        %v687 = vunpack.c.l.b16 %v671
        %v688 = vunpack.c.l.b16 %v672
        %v689 = vpack.c.b16 %v688, %v687
        %v691 = vsel %vm493, %v689, 0
        %v693 = vsel %vm497, %v667, 0
        %v695 = vsel %vm497, %v670, 0
        %697 = vmatpush.bf16.msra.mxu0 0
        %698 = vmatpush.bf16.msra.mxu0 0
        %699 = vmatpush.bf16.msra.mxu0 0
        %700 = vmatpush.bf16.msra.mxu0 0
        %701 = vmatpush.bf16.msra.mxu0 0
        %702 = vmatpush.bf16.msra.mxu0 0
        %703 = vmatpush.bf16.msra.mxu0 0
        %704 = vmatpush.bf16.msra.mxu0 %v693
        %705 = vmatmul.bf16.gmra.mxu0 %v691
        %v706 = vpop.f32.mrf.mxu0
        %v707 = vadd.f32 %v678, %v706
        %v708 = vpop.f32.mrf.mxu0
        %v709 = vadd.f32 %v683, %v708
        %710 = vdwg.mxu0
        %711 = vmatpush.bf16.msra.mxu0 0
        %712 = vmatpush.bf16.msra.mxu0 0
        %713 = vmatpush.bf16.msra.mxu0 0
        %714 = vmatpush.bf16.msra.mxu0 0
        %715 = vmatpush.bf16.msra.mxu0 0
        %716 = vmatpush.bf16.msra.mxu0 0
        %717 = vmatpush.bf16.msra.mxu0 0
        %718 = vmatpush.bf16.msra.mxu0 %v695
        %719 = vmatmul.bf16.gmra.mxu0 %v691
        %v720 = vpop.f32.mrf.mxu0
        %v721 = vadd.f32 %v678, %v720
        %v722 = vpop.f32.mrf.mxu0
        %v723 = vadd.f32 %v683, %v722
        %724 = vdwg.mxu0
        %v725 = vmul.f32 %v707, 0.01
        %v726 = vmul.f32 %v721, 0.01
        %v727 = vmul.f32 %v709, 0.01
        %v728 = vmul.f32 %v723, 0.01
        %v729 = vmax.f32 %v707, %v725
        %v730 = vmax.f32 %v721, %v726
        %v731 = vmax.f32 %v709, %v727
        %v732 = vmax.f32 %v723, %v728
        %v733 = vpack.c.bf16 %v730, %v729
        %v734 = vpack.c.bf16 %v732, %v731
        %735 = vst [vmem:[%s319] sm:$0xff] %v733
        %736 = vst [vmem:[%s319 + $0x8] sm:$0xff] %v734
        %s737 = sand.u32 %s187, 1
        %s738 = scalar_lea.sflag [#allocation5], %s737
        %s739 = sand.u32 %s187, 1
        %s740 = smul.addr %s739, 16
        %s741 = scalar_lea.vmem [#allocation6], %s740
        %s742 = sand.u32 %s213, 1
        %s743 = scalar_lea.sflag [#allocation8], %s742
        %s744 = sand.u32 %s213, 1
        %s745 = smul.addr %s744, 4
        %s746 = scalar_lea.vmem [#allocation7], %s745
        // Predicated region
        $region53: #{tpu_custom_call.1} parent=47 // pred_check
          %p747 = pneg %p197
        $region54: #{tpu_custom_call.1} parent=47 // pred_check_branch
          %749 = sbr.rel (%p747) target = $region56
        $region55: #{tpu_custom_call.1} parent=47 // pred_region
          %751 = vsyncadd %s738, 0
          %s752 = smul.addr %s27, 4
          %s753 = smul.addr %s752, 4
          %s754 = scalar_lea.hbm %s7, %s753
          %s755 = sshll.u32 %s741, 4
          %s756 = int_to_ptr.vmem [resolvable:$true] %s755
          %s757 = sshll.u32 %s754, 4
          %s758 = int_to_ptr.hbm [resolvable:$true] %s757
          %763 = dma.vmem_to_hbm [thread:$0]  %s756, 256, %s758, %s738, 128, 128, 8
        $region56: #{tpu_custom_call.1} parent=47 // pred_fallthru
          _
        // Predicated region
        $region57: #{tpu_custom_call.1} parent=47 // pred_check
          %p764 = pneg %p223
        $region58: #{tpu_custom_call.1} parent=47 // pred_check_branch
          %766 = sbr.rel (%p764) target = $region60
        $region59: #{tpu_custom_call.1} parent=47 // pred_region
          %768 = vsyncadd %s743, 0
          %s769 = smul.addr %s27, 2
          %s770 = smul.addr %s769, 2
          %s771 = scalar_lea.hbm %s8, %s770
          %s773 = sshll.u32 %s746, 4
          %s774 = int_to_ptr.vmem [resolvable:$true] %s773
          %s775 = sshll.u32 %s771, 4
          %s776 = int_to_ptr.hbm [resolvable:$true] %s775
          %778 = dma.vmem_to_hbm [thread:$0]  %s774, 64, %s776, %s743
        $region60: #{tpu_custom_call.1} parent=47 // pred_fallthru
          _
      $region48: #{tpu_custom_call.1} parent=5 // pred_fallthru
        _
      %p779 = scmp.le.s32.totalorder 2, %s22
      // Predicated region
      $region61: #{tpu_custom_call.1} parent=5 // pred_check
        %p780 = pneg %p779
      $region62: #{tpu_custom_call.1} parent=5 // pred_check_branch
        %782 = sbr.rel (%p780) target = $region64
      $region63: #{tpu_custom_call.1} parent=5 // pred_region
        %s783 = ssub.s32 %s22, 2
        // Predicated region
        $region65: #{tpu_custom_call.1} parent=63 // pred_check
          %p784 = pneg %p203
        $region66: #{tpu_custom_call.1} parent=63 // pred_check_branch
          %786 = sbr.rel (%p784) target = $region68
        $region67: #{tpu_custom_call.1} parent=63 // pred_region
          %s787 = sand.u32 %s188, 1
          %s788 = scalar_lea.sflag [#allocation5], %s787
          %s789 = sand.u32 %s188, 1
          %s790 = smul.addr %s789, 16
          %s791 = scalar_lea.vmem [#allocation6], %s790
          %793 = dma.done %s788, 256
        $region68: #{tpu_custom_call.1} parent=63 // pred_fallthru
          _
        // Predicated region
        $region69: #{tpu_custom_call.1} parent=63 // pred_check
          %p794 = pneg %p229
        $region70: #{tpu_custom_call.1} parent=63 // pred_check_branch
          %796 = sbr.rel (%p794) target = $region72
        $region71: #{tpu_custom_call.1} parent=63 // pred_region
          %s797 = sand.u32 %s214, 1
          %s798 = scalar_lea.sflag [#allocation8], %s797
          %s799 = sand.u32 %s214, 1
          %s800 = smul.addr %s799, 4
          %s801 = scalar_lea.vmem [#allocation7], %s800
          %803 = dma.done %s798, 64
        $region72: #{tpu_custom_call.1} parent=63 // pred_fallthru
          _
      $region64: #{tpu_custom_call.1} parent=5 // pred_fallthru
        _
    $region6: #{tpu_custom_call.1} parent=1 // loop_footer
      %s26 = sadd.s32 1, %s22
    $region7: #{tpu_custom_call.1} parent=1 // loop_footer_branch
      %21 = sbr.rel target = $region3
    $region8: #{tpu_custom_call.1} parent=1 // loop_exit
      _
    %804 = vsyncpa [#allocation4], 1
    %s805 = scalar_lea.sflag [#allocation4], 1
    %806 = vsyncpa %s805, 1
    %807 = vsyncpa [#allocation5], 1
    %s808 = scalar_lea.sflag [#allocation5], 1
    %809 = vsyncpa %s808, 1
    %810 = vsyncpa [#allocation8], 1
    %s811 = scalar_lea.sflag [#allocation8], 1
    %812 = vsyncpa %s811, 1

</llo_original>
